<compile_context>
chip_gen: v7x
topology: tpu7x:2x2x1
jax: 0.10.0
libtpu: 0.0.40
codegen_flags: <defaults>
</compile_context>

<pallas_src>
import functools

import jax
import jax.numpy as jnp
from jax.experimental import pallas as pl
from jax.experimental.pallas import tpu as pltpu

_LANES = 128


def _focal_loss_tile_kernel(logits_ref, targets_ref, out_ref, *,
                            alpha, gamma, gamma_is_int, n_valid, tile_n):
    # One tile of rows: (tile_n, c_pad) logits, (tile_n, 1) int32 targets.
    x = logits_ref[...]                       # (tile_n, c_pad) f32
    t = targets_ref[...]                      # (tile_n, 1)     i32

    # Numerically-stable log-softmax / cross-entropy (one exp per element).
    m = jnp.max(x, axis=-1, keepdims=True)                              # (tile_n, 1)
    lse = jnp.log(jnp.sum(jnp.exp(x - m), axis=-1, keepdims=True)) + m  # (tile_n, 1)

    # Gather logit at the target class via iota + masked sum (no gather on TPU).
    col = jax.lax.broadcasted_iota(jnp.int32, x.shape, 1)               # (tile_n, c_pad)
    sel = jnp.sum(jnp.where(col == t, x, 0.0), axis=-1, keepdims=True)  # (tile_n, 1)

    ce = lse - sel                                                      # per-sample CE
    pt = jnp.exp(-ce)
    d = 1.0 - pt

    # (1 - pt) ** gamma: integer gamma -> pure VPU multiplies (no EUP pow,
    # no NaN hazard from a slightly-negative base).
    if gamma_is_int:
        gi = int(gamma)
        w = jnp.ones_like(d)
        for _ in range(gi):
            w = w * d
    else:
        w = jnp.power(jnp.maximum(d, 0.0), gamma)

    focal = w * ce
    if alpha != 1.0:
        focal = alpha * focal

    # Mask rows that are batch padding (last tile); divisor stays true N
    # (applied outside the kernel).
    row = (jax.lax.broadcasted_iota(jnp.int32, focal.shape, 0)
           + pl.program_id(0) * tile_n)
    focal = jnp.where(row < n_valid, focal, 0.0)

    # Per-tile partial sum (final mean done in JAX outside the kernel).
    out_ref[...] = jnp.sum(focal).reshape(1, 1, 1)


def _choose_tile_n(n, c_pad):
    # Keep each double-buffered logits block small (<= ~2 MiB) so the
    # pipeline fits comfortably in scoped VMEM on v5e (16 MiB default) and
    # v7x (64 MiB physical) while still being large enough to hide DMA.
    max_rows_by_vmem = max(8, (2 * 1024 * 1024) // (c_pad * 4))
    tile = min(512, max_rows_by_vmem)
    tile = max(8, (tile // 8) * 8)
    n_pad8 = ((n + 7) // 8) * 8
    return min(tile, n_pad8)


def focal_loss(logits, targets, *, alpha=1.0, gamma=2.0):
    """logits: (N, C) float32, targets: (N,) int -> scalar float32 (mean focal loss)."""
    n, c = logits.shape
    logits = logits.astype(jnp.float32)
    targets = targets.astype(jnp.int32)

    # Pad class dim to full 128-lane vregs; fill with a large negative so
    # max / logsumexp and the target gather are unaffected.
    c_pad = ((c + _LANES - 1) // _LANES) * _LANES
    tile_n = _choose_tile_n(n, c_pad)
    n_pad = ((n + tile_n - 1) // tile_n) * tile_n
    num_tiles = n_pad // tile_n

    x_pad = jnp.pad(logits, ((0, 0), (0, c_pad - c)), constant_values=-1e30)
    x_pad = jnp.pad(x_pad, ((0, n_pad - n), (0, 0)), constant_values=0.0)
    t_pad = jnp.pad(targets, (0, n_pad - n), constant_values=0).reshape(n_pad, 1)

    gamma_f = float(gamma)
    gamma_is_int = gamma_f.is_integer() and gamma_f >= 0.0

    kernel = functools.partial(
        _focal_loss_tile_kernel,
        alpha=float(alpha),
        gamma=gamma_f,
        gamma_is_int=gamma_is_int,
        n_valid=int(n),
        tile_n=int(tile_n),
    )

    # Explicit VMEM budget: 2x double-buffered inputs + headroom.
    vmem_need = 2 * (tile_n * c_pad * 4 + tile_n * 4) + (1 << 16)
    vmem_limit = min(32 * 1024 * 1024, max(4 * 1024 * 1024, 4 * vmem_need))

    cost = pl.CostEstimate(
        flops=int(6 * n_pad * c_pad + 12 * n_pad),
        transcendentals=int(n_pad * c_pad + 2 * n_pad),
        bytes_accessed=int(n_pad * c_pad * 4 + n_pad * 4 + num_tiles * 4),
    )

    partials = pl.pallas_call(
        kernel,
        out_shape=jax.ShapeDtypeStruct((num_tiles, 1, 1), jnp.float32),
        grid_spec=pltpu.PrefetchScalarGridSpec(
            num_scalar_prefetch=0,
            grid=(num_tiles,),
            in_specs=[
                pl.BlockSpec((tile_n, c_pad), lambda i: (i, 0)),
                pl.BlockSpec((tile_n, 1), lambda i: (i, 0)),
            ],
            out_specs=pl.BlockSpec((1, 1, 1), lambda i: (i, 0, 0)),
        ),
        compiler_params=pltpu.CompilerParams(
            dimension_semantics=("parallel",),
            vmem_limit_bytes=int(vmem_limit),
        ),
        cost_estimate=cost,
    )(x_pad, t_pad)

    # reduction='mean' over the true (unpadded) batch.
    return jnp.sum(partials) * jnp.float32(1.0 / n)


def _reference_focal_loss(logits, targets, alpha=1.0, gamma=2.0):
    lse = jax.nn.logsumexp(logits, axis=-1)
    sel = jnp.take_along_axis(logits, targets[:, None], axis=-1)[:, 0]
    ce = lse - sel
    pt = jnp.exp(-ce)
    return jnp.mean(alpha * (1.0 - pt) ** gamma * ce)


if __name__ == "__main__":
    key = jax.random.PRNGKey(0)
    k1, k2 = jax.random.split(key)

    N, C = 8, 32                      # small batch of 8 samples, 32 classes
    logits = jax.random.normal(k1, (N, C), dtype=jnp.float32)
    targets = jax.random.randint(k2, (N,), 0, C, dtype=jnp.int32)

    loss = focal_loss(logits, targets, alpha=1.0, gamma=2.0)
    loss = jax.block_until_ready(loss)

    ref = _reference_focal_loss(logits, targets)
    assert jnp.allclose(loss, ref, atol=1e-5, rtol=1e-5), (loss, ref)

    print("KERNEL_OK")
</pallas_src>

<mosaic_0001>
module attributes {stable_mosaic.version = 11 : i64} {
  func.func @_focal_loss_tile_kernel(%arg0: i32, %arg1: memref<8x128xf32, #tpu.memory_space<vmem>>, %arg2: memref<8x1xi32, #tpu.memory_space<vmem>>, %arg3: memref<1x1x1xf32, #tpu.memory_space<vmem>>) attributes {dimension_semantics = [#tpu.dimension_semantics<parallel>], iteration_bounds = array<i64: 1>, scalar_prefetch = 0 : i64, scratch_operands = 0 : i64, tpu.core_type = #tpu.core_type<tc>, window_params = [{transform_indices = @transform_0, window_bounds = array<i64: 8, 128>}, {transform_indices = @transform_1, window_bounds = array<i64: 8, 1>}, {transform_indices = @transform_2, window_bounds = array<i64: 1, 1, 1>}]} {
    %c0 = arith.constant 0 : index
    %c0_0 = arith.constant 0 : index
    %0 = vector.load %arg1[%c0, %c0_0] : memref<8x128xf32, #tpu.memory_space<vmem>>, vector<8x128xf32>
    %c0_1 = arith.constant 0 : index
    %c0_2 = arith.constant 0 : index
    %1 = vector.load %arg2[%c0_1, %c0_2] : memref<8x1xi32, #tpu.memory_space<vmem>>, vector<8x1xi32>
    %cst = arith.constant dense<0xFF800000> : vector<8xf32>
    %2 = vector.multi_reduction <maximumf>, %0, %cst [1] : vector<8x128xf32> to vector<8xf32>
    %3 = vector.shape_cast %2 : vector<8xf32> to vector<8x1xf32>
    %4 = vector.broadcast %3 : vector<8x1xf32> to vector<8x128xf32>
    %5 = arith.subf %0, %4 : vector<8x128xf32>
    %6 = math.exp %5 : vector<8x128xf32>
    %cst_3 = arith.constant dense<0.000000e+00> : vector<8xf32>
    %7 = vector.multi_reduction <add>, %6, %cst_3 [1] : vector<8x128xf32> to vector<8xf32>
    %8 = vector.shape_cast %7 : vector<8xf32> to vector<8x1xf32>
    %9 = math.log %8 : vector<8x1xf32>
    %10 = arith.addf %9, %3 : vector<8x1xf32>
    %11 = tpu.iota {dimensions = array<i32: 1>} : vector<8x128xi32>
    %12 = vector.broadcast %1 : vector<8x1xi32> to vector<8x128xi32>
    %13 = arith.cmpi eq, %11, %12 : vector<8x128xi32>
    %cst_4 = arith.constant 0.000000e+00 : f32
    %14 = vector.broadcast %cst_4 : f32 to vector<8x128xf32>
    %15 = arith.select %13, %0, %14 : vector<8x128xi1>, vector<8x128xf32>
    %cst_5 = arith.constant dense<0.000000e+00> : vector<8xf32>
    %16 = vector.multi_reduction <add>, %15, %cst_5 [1] : vector<8x128xf32> to vector<8xf32>
    %17 = vector.shape_cast %16 : vector<8xf32> to vector<8x1xf32>
    %18 = arith.subf %10, %17 : vector<8x1xf32>
    %cst_6 = arith.constant 0.000000e+00 : f32
    %19 = vector.broadcast %cst_6 : f32 to vector<8x1xf32>
    %20 = arith.subf %19, %18 : vector<8x1xf32>
    %21 = math.exp %20 : vector<8x1xf32>
    %cst_7 = arith.constant 1.000000e+00 : f32
    %22 = vector.broadcast %cst_7 : f32 to vector<8x1xf32>
    %23 = arith.subf %22, %21 : vector<8x1xf32>
    %cst_8 = arith.constant 1.000000e+00 : f32
    %24 = vector.broadcast %cst_8 : f32 to vector<8x1xf32>
    %25 = arith.mulf %24, %23 : vector<8x1xf32>
    %26 = arith.mulf %25, %23 : vector<8x1xf32>
    %27 = arith.mulf %26, %18 : vector<8x1xf32>
    %28 = tpu.iota {dimensions = array<i32: 0>} : vector<8x1xi32>
    %c8_i32 = arith.constant 8 : i32
    %29 = arith.muli %arg0, %c8_i32 : i32
    %30 = vector.broadcast %29 : i32 to vector<8x1xi32>
    %31 = arith.addi %28, %30 : vector<8x1xi32>
    %c8_i32_9 = arith.constant 8 : i32
    %32 = vector.broadcast %c8_i32_9 : i32 to vector<8x1xi32>
    %33 = arith.cmpi slt, %31, %32 : vector<8x1xi32>
    %cst_10 = arith.constant 0.000000e+00 : f32
    %34 = vector.broadcast %cst_10 : f32 to vector<8x1xf32>
    %35 = arith.select %33, %27, %34 : vector<8x1xi1>, vector<8x1xf32>
    %36 = vector.shape_cast %35 : vector<8x1xf32> to vector<1x8x1xf32>
    %cst_11 = arith.constant dense<0.000000e+00> : vector<1xf32>
    %37 = vector.multi_reduction <add>, %36, %cst_11 [1, 2] : vector<1x8x1xf32> to vector<1xf32>
    %38 = vector.shape_cast %37 : vector<1xf32> to vector<1x1x1xf32>
    %39 = vector.extract %38[0, 0, 0] : f32 from vector<1x1x1xf32>
    %40 = vector.broadcast %39 : f32 to vector<1x1x1xf32>
    %c0_12 = arith.constant 0 : index
    %c0_13 = arith.constant 0 : index
    %c0_14 = arith.constant 0 : index
    %41 = vector.load %arg3[%c0_12, %c0_13, %c0_14] : memref<1x1x1xf32, #tpu.memory_space<vmem>>, vector<1x1x1xf32>
    tpu.vector_store %arg3[%c0_12, %c0_13, %c0_14], %40 {strides = array<i32>} : memref<1x1x1xf32, #tpu.memory_space<vmem>>, vector<1x1x1xf32>,
    return
  }
  func.func @transform_0(%arg0: i32) -> (i32, i32) {
    %c0_i32 = arith.constant 0 : i32
    %c0_i32_0 = arith.constant 0 : i32
    return %arg0, %c0_i32 : i32, i32
  }
  func.func @transform_1(%arg0: i32) -> (i32, i32) {
    %c0_i32 = arith.constant 0 : i32
    %c0_i32_0 = arith.constant 0 : i32
    return %arg0, %c0_i32 : i32, i32
  }
  func.func @transform_2(%arg0: i32) -> (i32, i32, i32) {
    %c0_i32 = arith.constant 0 : i32
    %c0_i32_0 = arith.constant 0 : i32
    %c0_i32_1 = arith.constant 0 : i32
    return %arg0, %c0_i32, %c0_i32_0 : i32, i32, i32
  }
}

</mosaic_0001>

<llo_original>
// kernel: tpu_custom_call.1
$region0: #{tpu_custom_call.1}
  #allocation0 [shape = 'u32[]', space=smem, size = 0x4, offset = 0x4, fixed_abs, tag = 'smem constant byte address 0x4 - core index']
  #allocation1 [shape = 'u32[144,128]{1,0:T(1,128)}', space=vmem, size = 0x12000, scoped, tag = 'internal scratch']
  %s0 = inlined_call_operand.vmem [shape: f32[8,128], index: 0, kind: input, shape index: {}]
  %s1 = inlined_call_operand.vmem [shape: s32[8,1], index: 1, kind: input, shape index: {}]
  %s2 = inlined_call_operand.hbm [shape: f32[1,1,1], index: 2, kind: output, shape index: {}]
  %s3 = sld [smem:[#allocation0]]
  $region18: #{tpu_custom_call.1} parent=0
    _
  %s5 = ssub.s32 1, %s3
  %s6 = scalar_select 0, %s5, %s3
  $region1: #{tpu_custom_call.1} parent=0
    #allocation2 [shape = 'u8[512]{0}', space=vmem, size = 0x400, scoped, tag = 'output window, operand 0, single buffered']
    #allocation3 [shape = 's32[1]{0}', space=sflag, size = 0x4, scoped, tag = 'scoped memory for tpu_custom_call.1']
    %7 = vsyncpa [#allocation3], 0
    // Predicated region
    $region2: #{tpu_custom_call.1} parent=1 // pred_check
      _
    $region3: #{tpu_custom_call.1} parent=1 // pred_check_branch
      %9 = sbr.rel (0) target = $region5
    $region4: #{tpu_custom_call.1} parent=1 // pred_region
      _
    $region5: #{tpu_custom_call.1} parent=1 // pred_fallthru
      _
    // Predicated region
    $region6: #{tpu_custom_call.1} parent=1 // pred_check
      _
    $region7: #{tpu_custom_call.1} parent=1 // pred_check_branch
      %11 = sbr.rel (0) target = $region9
    $region8: #{tpu_custom_call.1} parent=1 // pred_region
      _
    $region9: #{tpu_custom_call.1} parent=1 // pred_fallthru
      _
    %v12 = vld [vmem:[%s0] sm:$0xff]
    %v13 = vld [vmem:[%s1] sm:$0xff]
    %14 = vmax.xlane.f32.xlu0 %v12
    %v15 = vpop.xlane.xlu0 %14
    %v16 = vsub.f32 %v12, %v15
    %v17 = vmul.f32 %v16, 1.442695
    %v18 = vpow.pop %v17
    %19 = vadd.xlane.f32.xlu0 %v18
    %v20 = vpop.xlane.xlu0 %19
    %v21 = vlog2.pop %v20
    %v22 = vmul.f32 %v21, 0.6931472
    %v23 = vadd.f32 %v22, %v15
    %v24 = vlaneseq
    %v25 = vand.u32 %v24, 127
    %26 = vset.pattern.permute.xlu0 0
    %27 = vperm.xlu0 %26, %v13
    %v28 = vpop.permute.xlu0 %27
    %vm29 = vcmp.eq.s32.totalorder %v25, %v28
    %v30 = vsel %vm29, %v12, 0.0
    %31 = vadd.xlane.f32.xlu0 %v30
    %v32 = vpop.xlane.xlu0 %31
    %v33 = vsub.f32 %v23, %v32
    %v34 = vsub.f32 0.0, %v33
    %v35 = vmul.f32 %v34, 1.442695
    %v36 = vpow.pop %v35
    %v37 = vsub.f32 1.0, %v36
    %v38 = vmul.f32 %v37, %v37
    %v39 = vmul.f32 %v38, %v33
    %v40 = vlaneseq
    %v41 = vshrl.u32 %v40, 7
    %s42 = smul.u32 0, 8
    %v43 = vstv %s42
    %v44 = vadd.s32 %v41, %v43
    %vm45 = vcmp.lt.s32.totalorder %v44, 8
    %v46 = vsel %vm45, %v39, 0.0
    %vm47 = vcmask 7168
    %v48 = vsel %vm47, %v46, 0.0
    %49 = vadd.xlane.f32.xlu0 %v48
    %v50 = vpop.xlane.xlu0 %49
    %v51 = vrot.slane %v50, 4
    %v52 = vadd.f32 %v50, %v51
    %v53 = vrot.slane %v52, 2
    %v54 = vadd.f32 %v52, %v53
    %v55 = vrot.slane %v54, 1
    %v56 = vadd.f32 %v54, %v55
    %s57 = vtos %v56
    %v58 = vstv %s57
    %vm59 = vcmask 0
    %60 = vst.msk [vmem:[#allocation2] sm:$0x1] %vm59, %v58
    // Predicated region
    $region10: #{tpu_custom_call.1} parent=1 // pred_check
      _
    $region11: #{tpu_custom_call.1} parent=1 // pred_check_branch
      %62 = sbr.rel (0) target = $region13
    $region12: #{tpu_custom_call.1} parent=1 // pred_region
      %s64 = ssub.s32 16, 16
      %65 = vsyncadd [#allocation3], %s64
      %s67 = sshll.u32 [#allocation2], 4
      %s68 = int_to_ptr.vmem [resolvable:$true] %s67
      %70 = dma.vmem_to_hbm [thread:$0]  %s68, 16, %s2, [#allocation3]
    $region13: #{tpu_custom_call.1} parent=1 // pred_fallthru
      _
    // Predicated region
    $region14: #{tpu_custom_call.1} parent=1 // pred_check
      _
    $region15: #{tpu_custom_call.1} parent=1 // pred_check_branch
      %72 = sbr.rel (0) target = $region17
    $region16: #{tpu_custom_call.1} parent=1 // pred_region
      %73 = dma.done [#allocation3], 16
    $region17: #{tpu_custom_call.1} parent=1 // pred_fallthru
      _
    %74 = vsyncpa [#allocation3], 1

</llo_original>
